<compile_context>
chip_gen: v7x
topology: tpu7x:2x2x1
jax: 0.10.0
libtpu: 0.0.40
codegen_flags: <defaults>
</compile_context>

<pallas_src>
import jax
import jax.numpy as jnp
from jax.experimental import pallas as pl
from jax.experimental.pallas import tpu as pltpu


_PALLAS_MIN_BYTES = 64 * 1024                 # below this, use the fused XLA gather
_MIN_SPLIT_TILE_BYTES = 512 * 1024            # only add grid steps if each carries >= this
_ITEMS_TILE_BUDGET_BYTES = 4 * 1024 * 1024    # per items tile (Pallas double-buffers it)


def _decoder_kernel(node_ref, items_ref, out_ref):
    node = node_ref[...]                                   # (TB, 1) int32
    items = items_ref[...]                                 # (TB, N) native dtype
    lane_idx = jax.lax.broadcasted_iota(jnp.int32, items.shape, 1)
    onehot = lane_idx == (node - 1)                        # (TB, N), at most one hit/row
    # Mask in the native (narrow) dtype, reduce over lanes, accumulate in int32.
    masked = jnp.where(onehot, items, jnp.zeros((), items.dtype))
    gathered = jnp.sum(masked, axis=1, dtype=jnp.int32, keepdims=True)   # (TB, 1)
    out_ref[...] = jnp.where(node != 0, gathered, jnp.int32(-1))


def _pick_batch_tile(B, N, itemsize):
    """Rows per grid step (multiple of 8, or the full batch for one step)."""
    row_bytes = max(1, N * itemsize)
    total = B * row_bytes
    # Small payload (or un-tileable batch): one grid step, zero per-step overhead.
    if total < 2 * _MIN_SPLIT_TILE_BYTES or B < 16:
        return B
    # Even number of steps so v7x's two TensorCores split evenly; each step
    # within the per-tile budget.
    steps = 2
    while -(-total // steps) > _ITEMS_TILE_BUDGET_BYTES:
        steps += 2
    tile = -(-B // steps)          # ceil
    tile = -(-tile // 8) * 8       # round up to a sublane multiple
    return min(tile, B)


def _vmem_limit_bytes(items_tile_bytes):
    try:
        cap = int(pltpu.get_tpu_info().vmem_capacity_bytes)
    except Exception:
        cap = 64 * 1024 * 1024     # v7x floor; also safe on v5e/v6e
    want = max(32 * 1024 * 1024, 8 * items_tile_bytes)
    return int(min(want, cap - 8 * 1024 * 1024))


def flattened_item_decoder(node, item_ids, *, force_pallas=False):
    """node: (B,) int, item_ids: (B, N) int -> (B,) int32.

    out[b] = item_ids[b, node[b]-1] if node[b] != 0 else -1
    """
    B, N = item_ids.shape
    node_i32 = node.astype(jnp.int32)

    if not force_pallas and B * N * item_ids.dtype.itemsize < _PALLAS_MIN_BYTES:
        # Tiny decode step: fused XLA gather beats a pallas_call launch.
        idx = jnp.clip(node_i32 - 1, 0, N - 1)
        gathered = jnp.take_along_axis(
            item_ids.astype(jnp.int32), idx[:, None], axis=1)[:, 0]
        return jnp.where(node_i32 != 0, gathered, jnp.int32(-1))

    tile = _pick_batch_tile(B, N, item_ids.dtype.itemsize)
    grid = (pl.cdiv(B, tile),)      # partial last block handled by Pallas masking
    items_tile_bytes = tile * N * item_ids.dtype.itemsize

    out = pl.pallas_call(
        _decoder_kernel,
        out_shape=jax.ShapeDtypeStruct((B, 1), jnp.int32),
        grid=grid,
        in_specs=[
            pl.BlockSpec((tile, 1), lambda i: (i, 0)),   # node  (B, 1)
            pl.BlockSpec((tile, N), lambda i: (i, 0)),   # items (B, N), native dtype
        ],
        out_specs=pl.BlockSpec((tile, 1), lambda i: (i, 0)),
        compiler_params=pltpu.CompilerParams(
            dimension_semantics=("parallel",),
            vmem_limit_bytes=_vmem_limit_bytes(items_tile_bytes)),
    )(node_i32.reshape(B, 1), item_ids)
    return out.reshape(B)


def _reference(node, item_ids):
    node = node.astype(jnp.int32)
    idx = jnp.clip(node - 1, 0, item_ids.shape[1] - 1)
    gathered = jnp.take_along_axis(item_ids.astype(jnp.int32), idx[:, None], axis=1)[:, 0]
    return jnp.where(node != 0, gathered, jnp.int32(-1))


if __name__ == "__main__":
    key = jax.random.PRNGKey(0)
    k1, k2, k3, k4, k5, k6 = jax.random.split(key, 6)

    # Small case matching the module's typical decode step.
    # Exercise both the Pallas kernel (forced) and the tiny-input fast path.
    B, N = 8, 16
    node = jax.random.randint(k1, (B,), 0, N + 1, dtype=jnp.int32)      # 0 == depot
    item_ids = jax.random.randint(k2, (B, N), 0, 100, dtype=jnp.int32)
    ref = _reference(node, item_ids)
    out_pallas = jax.block_until_ready(flattened_item_decoder(node, item_ids, force_pallas=True))
    assert out_pallas.shape == (B,) and out_pallas.dtype == jnp.int32
    assert jnp.array_equal(out_pallas, ref), (out_pallas, ref)
    out_fast = jax.block_until_ready(flattened_item_decoder(node, item_ids))
    assert jnp.array_equal(out_fast, ref)

    # Medium case: naturally takes the Pallas path (single grid step).
    B2, N2 = 512, 48
    node2 = jax.random.randint(k3, (B2,), 0, N2 + 1, dtype=jnp.int32)
    item_ids2 = jax.random.randint(k4, (B2, N2), 0, 1000, dtype=jnp.int32)
    out2 = jax.block_until_ready(flattened_item_decoder(node2, item_ids2))
    assert out2.shape == (B2,) and out2.dtype == jnp.int32
    assert jnp.array_equal(out2, _reference(node2, item_ids2))

    # Larger narrow-dtype case: exercises the multi-step (even) grid and the
    # mask-before-widen path (items streamed as int16).
    B3, N3 = 2048, 256
    node3 = jax.random.randint(k5, (B3,), 0, N3 + 1, dtype=jnp.int32)
    item_ids3 = jax.random.randint(k6, (B3, N3), 0, 1000, dtype=jnp.int32).astype(jnp.int16)
    out3 = jax.block_until_ready(flattened_item_decoder(node3, item_ids3))
    assert out3.shape == (B3,) and out3.dtype == jnp.int32
    assert jnp.array_equal(out3, _reference(node3, item_ids3))

    print("KERNEL_OK")
</pallas_src>

<mosaic_0001>
module attributes {stable_mosaic.version = 11 : i64} {
  func.func @_decoder_kernel(%arg0: i32, %arg1: memref<8x1xi32, #tpu.memory_space<vmem>>, %arg2: memref<8x16xi32, #tpu.memory_space<vmem>>, %arg3: memref<8x1xi32, #tpu.memory_space<vmem>>) attributes {dimension_semantics = [#tpu.dimension_semantics<parallel>], iteration_bounds = array<i64: 1>, scalar_prefetch = 0 : i64, scratch_operands = 0 : i64, tpu.core_type = #tpu.core_type<tc>, window_params = [{transform_indices = @transform_0, window_bounds = array<i64: 8, 1>}, {transform_indices = @transform_1, window_bounds = array<i64: 8, 16>}, {transform_indices = @transform_2, window_bounds = array<i64: 8, 1>}]} {
    %c0 = arith.constant 0 : index
    %c0_0 = arith.constant 0 : index
    %0 = vector.load %arg1[%c0, %c0_0] : memref<8x1xi32, #tpu.memory_space<vmem>>, vector<8x1xi32>
    %c0_1 = arith.constant 0 : index
    %c0_2 = arith.constant 0 : index
    %1 = vector.load %arg2[%c0_1, %c0_2] : memref<8x16xi32, #tpu.memory_space<vmem>>, vector<8x16xi32>
    %2 = tpu.iota {dimensions = array<i32: 1>} : vector<8x16xi32>
    %c1_i32 = arith.constant 1 : i32
    %3 = vector.broadcast %c1_i32 : i32 to vector<8x1xi32>
    %4 = arith.subi %0, %3 : vector<8x1xi32>
    %5 = vector.broadcast %4 : vector<8x1xi32> to vector<8x16xi32>
    %6 = arith.cmpi eq, %2, %5 : vector<8x16xi32>
    %c0_i32 = arith.constant 0 : i32
    %7 = vector.broadcast %c0_i32 : i32 to vector<8x16xi32>
    %8 = arith.select %6, %1, %7 : vector<8x16xi1>, vector<8x16xi32>
    %cst = arith.constant dense<0> : vector<8xi32>
    %9 = vector.multi_reduction <add>, %8, %cst [1] : vector<8x16xi32> to vector<8xi32>
    %10 = vector.shape_cast %9 : vector<8xi32> to vector<8x1xi32>
    %c0_i32_3 = arith.constant 0 : i32
    %11 = vector.broadcast %c0_i32_3 : i32 to vector<8x1xi32>
    %12 = arith.cmpi ne, %0, %11 : vector<8x1xi32>
    %c-1_i32 = arith.constant -1 : i32
    %13 = vector.broadcast %c-1_i32 : i32 to vector<8x1xi32>
    %14 = arith.select %12, %10, %13 : vector<8x1xi1>, vector<8x1xi32>
    %c0_4 = arith.constant 0 : index
    %c0_5 = arith.constant 0 : index
    %15 = vector.load %arg3[%c0_4, %c0_5] : memref<8x1xi32, #tpu.memory_space<vmem>>, vector<8x1xi32>
    tpu.vector_store %arg3[%c0_4, %c0_5], %14 {strides = array<i32>} : memref<8x1xi32, #tpu.memory_space<vmem>>, vector<8x1xi32>,
    return
  }
  func.func @transform_0(%arg0: i32) -> (i32, i32) {
    %c0_i32 = arith.constant 0 : i32
    %c0_i32_0 = arith.constant 0 : i32
    return %arg0, %c0_i32 : i32, i32
  }
  func.func @transform_1(%arg0: i32) -> (i32, i32) {
    %c0_i32 = arith.constant 0 : i32
    %c0_i32_0 = arith.constant 0 : i32
    return %arg0, %c0_i32 : i32, i32
  }
  func.func @transform_2(%arg0: i32) -> (i32, i32) {
    %c0_i32 = arith.constant 0 : i32
    %c0_i32_0 = arith.constant 0 : i32
    return %arg0, %c0_i32 : i32, i32
  }
}

</mosaic_0001>

<llo_original>
// kernel: tpu_custom_call.1
$region0: #{tpu_custom_call.1}
  #allocation0 [shape = 'u32[]', space=smem, size = 0x4, offset = 0x4, fixed_abs, tag = 'smem constant byte address 0x4 - core index']
  #allocation1 [shape = 'u32[144,128]{1,0:T(1,128)}', space=vmem, size = 0x12000, scoped, tag = 'internal scratch']
  %s0 = inlined_call_operand.vmem [shape: s32[8,1], index: 0, kind: input, shape index: {}]
  %s1 = inlined_call_operand.vmem [shape: s32[8,16], index: 1, kind: input, shape index: {}]
  %s2 = inlined_call_operand.vmem [shape: s32[8,1], index: 2, kind: output, shape index: {}]
  %s3 = sld [smem:[#allocation0]]
  $region18: #{tpu_custom_call.1} parent=0
    _
  %s5 = ssub.s32 1, %s3
  %s6 = scalar_select 0, %s5, %s3
  // Predicated region
  $region2: #{tpu_custom_call.1} parent=0 // pred_check
    _
  $region3: #{tpu_custom_call.1} parent=0 // pred_check_branch
    %8 = sbr.rel (0) target = $region5
  $region4: #{tpu_custom_call.1} parent=0 // pred_region
    _
  $region5: #{tpu_custom_call.1} parent=0 // pred_fallthru
    _
  // Predicated region
  $region6: #{tpu_custom_call.1} parent=0 // pred_check
    _
  $region7: #{tpu_custom_call.1} parent=0 // pred_check_branch
    %10 = sbr.rel (0) target = $region9
  $region8: #{tpu_custom_call.1} parent=0 // pred_region
    _
  $region9: #{tpu_custom_call.1} parent=0 // pred_fallthru
    _
  %v11 = vld [vmem:[%s0] sm:$0xff]
  %v12 = vld [vmem:[%s1] sm:$0xff]
  %v13 = vlaneseq
  %v14 = vand.u32 %v13, 127
  %v15 = vsub.s32 %v11, 1
  %16 = vset.pattern.permute.xlu0 0
  %17 = vperm.xlu0 %16, %v15
  %v18 = vpop.permute.xlu0 %17
  %vm19 = vcmp.eq.s32.totalorder %v14, %v18
  %v20 = vsel %vm19, %v12, 0
  %vm21 = vcmask 130048
  %v22 = vsel %vm21, %v20, 0
  %v23 = vand.u32 %v22, 65535
  %v24 = vshrl.u32 %v22, 16
  %v25 = vcvt.s32.f32 %v23
  %v26 = vcvt.s32.f32 %v24
  %27 = vadd.xlane.f32.xlu0 %v25
  %v28 = vpop.xlane.xlu0 %27
  %29 = vadd.xlane.f32.xlu0 %v26
  %v30 = vpop.xlane.xlu0 %29
  %v31 = vcvt.f32.s32 %v28
  %v32 = vcvt.f32.s32 %v30
  %v33 = vshll.u32 %v32, 16
  %v34 = vadd.s32 %v33, %v31
  %vm35 = vcmp.ne.s32.totalorder %v11, 0
  %v36 = vsel %vm35, %v34, 4294967295
  %vm37 = vcmask 7168
  %38 = vst.msk [vmem:[%s2] sm:$0xff] %vm37, %v36
  // Predicated region
  $region10: #{tpu_custom_call.1} parent=0 // pred_check
    _
  $region11: #{tpu_custom_call.1} parent=0 // pred_check_branch
    %40 = sbr.rel (0) target = $region13
  $region12: #{tpu_custom_call.1} parent=0 // pred_region
    _
  $region13: #{tpu_custom_call.1} parent=0 // pred_fallthru
    _
  // Predicated region
  $region14: #{tpu_custom_call.1} parent=0 // pred_check
    _
  $region15: #{tpu_custom_call.1} parent=0 // pred_check_branch
    %42 = sbr.rel (0) target = $region17
  $region16: #{tpu_custom_call.1} parent=0 // pred_region
    _
  $region17: #{tpu_custom_call.1} parent=0 // pred_fallthru
    _

</llo_original>
